<compile_context>
chip_gen: v7x
topology: tpu7x:2x2x1
jax: 0.10.0
libtpu: 0.0.40
codegen_flags: <defaults>
</compile_context>

<pallas_src>
import jax
import jax.numpy as jnp
from jax.experimental import pallas as pl
from jax.experimental.pallas import tpu as pltpu


def _mish_kernel(x_ref, o_ref):
    x = x_ref[...].astype(jnp.float32)
    # mish(x) = x * tanh(softplus(x)) = x * (t^2 + 2t) / (t^2 + 2t + 2), t = e^x.
    # One EUP transcendental (exp) + one EUP approx reciprocal + Newton step.
    xc = jnp.minimum(x, 20.0)            # guard exp overflow; mish(x) ~= x for x > 20
    t = jnp.exp(xc)
    u = t * (t + 2.0)
    d = u + 2.0
    r = pl.reciprocal(d, approx=True)    # EUP vrcp (~2^-12 rel err), off the VALU
    r = r * (2.0 - d * r)                # one Newton step -> ~1e-7 rel err (<< 1e-5 rtol)
    y = x * u * r
    y = jnp.where(x > 20.0, x, y)
    o_ref[...] = y.astype(o_ref.dtype)


def _choose_lane_width(n):
    """Widest lane dim (multiple of 128) that divides n exactly."""
    for lanes in (2048, 1024, 512, 256, 128):
        if n % lanes == 0:
            return lanes
    return None


def _sublane_multiple(dtype):
    """Sublane packing multiple: 8 for 32-bit, 16 for 16-bit, 32 for 8-bit."""
    itemsize = jnp.dtype(dtype).itemsize
    return max(8, 32 // itemsize)


def _mish_jnp(x):
    """Fused jnp fallback for shapes whose numel is not a multiple of 128."""
    xf = x.astype(jnp.float32)
    return (xf * jnp.tanh(jax.nn.softplus(xf))).astype(x.dtype)


def mish(x, *, target_block_bytes=4 * 1024 * 1024):
    """Elementwise Mish. Accepts any shape (e.g. NCHW); returns same shape/dtype."""
    orig_shape = x.shape
    orig_dtype = x.dtype
    n = x.size
    itemsize = jnp.dtype(orig_dtype).itemsize

    lanes = _choose_lane_width(n)
    if lanes is None:
        # Rare tail path (n % 128 != 0): a fused jnp op beats pad + kernel + slice
        # (which would add two extra full HBM passes around a BW-bound op).
        return _mish_jnp(x)

    rows = n // lanes
    x2d = jnp.ravel(x).reshape(rows, lanes)

    sub = _sublane_multiple(orig_dtype)
    row_bytes = lanes * itemsize

    # Base tile from the byte budget, rounded to the sublane-packing multiple.
    tr = max(sub, ((target_block_bytes // row_bytes) // sub) * sub)

    # Megacore clamp: aim for ~8 blocks so the "parallel" axis gives both TCs
    # work on v7x, but never shrink blocks below ~512 KiB (per-step overhead).
    desired_blocks = 8
    rows_for_desired = max(sub, ((pl.cdiv(rows, desired_blocks) + sub - 1) // sub) * sub)
    min_rows_per_block = max(sub, (((512 * 1024) // row_bytes) // sub) * sub)
    tile_rows = min(tr, max(rows_for_desired, min_rows_per_block))
    if tile_rows >= rows:
        tile_rows = rows                 # small input: single full-extent block
    grid = (pl.cdiv(rows, tile_rows),)   # Pallas masks the partial last block

    out2d = pl.pallas_call(
        _mish_kernel,
        out_shape=jax.ShapeDtypeStruct((rows, lanes), orig_dtype),
        grid_spec=pltpu.PrefetchScalarGridSpec(
            num_scalar_prefetch=0,
            grid=grid,
            in_specs=[pl.BlockSpec((tile_rows, lanes), lambda i: (i, 0))],
            out_specs=pl.BlockSpec((tile_rows, lanes), lambda i: (i, 0)),
        ),
        compiler_params=pltpu.CompilerParams(
            dimension_semantics=("parallel",),   # shards grid across the 2 TCs on v7x
            vmem_limit_bytes=48 << 20,           # 4 MiB blocks x 2 bufs x (in+out) = 16 MiB
        ),
        cost_estimate=pl.CostEstimate(
            flops=12 * n,
            transcendentals=2 * n,               # exp + vrcp
            bytes_accessed=2 * n * itemsize,
        ),
    )(x2d)

    return out2d.reshape(orig_shape)


def mish_ref(x):
    xf = x.astype(jnp.float32)
    return (xf * jnp.tanh(jax.nn.softplus(xf))).astype(x.dtype)


if __name__ == "__main__":
    key = jax.random.PRNGKey(0)
    x = jax.random.normal(key, (2, 4, 16, 16), dtype=jnp.float32)  # NCHW

    y = mish(x)
    y = jax.block_until_ready(y)

    y_ref = mish_ref(x)
    assert y.shape == x.shape and y.dtype == x.dtype
    assert jnp.allclose(y, y_ref, atol=1e-5, rtol=1e-5)
    print("KERNEL_OK")
</pallas_src>

<mosaic_0001>
module attributes {stable_mosaic.version = 11 : i64} {
  func.func @_mish_kernel(%arg0: i32, %arg1: memref<1x2048xf32, #tpu.memory_space<vmem>>, %arg2: memref<1x2048xf32, #tpu.memory_space<vmem>>) attributes {dimension_semantics = [#tpu.dimension_semantics<parallel>], iteration_bounds = array<i64: 1>, scalar_prefetch = 0 : i64, scratch_operands = 0 : i64, tpu.core_type = #tpu.core_type<tc>, window_params = [{transform_indices = @transform_0, window_bounds = array<i64: 1, 2048>}, {transform_indices = @transform_1, window_bounds = array<i64: 1, 2048>}]} {
    %c0 = arith.constant 0 : index
    %c0_0 = arith.constant 0 : index
    %0 = vector.load %arg1[%c0, %c0_0] : memref<1x2048xf32, #tpu.memory_space<vmem>>, vector<1x2048xf32>
    %cst = arith.constant 2.000000e+01 : f32
    %1 = vector.broadcast %cst : f32 to vector<1x2048xf32>
    %2 = arith.minimumf %0, %1 : vector<1x2048xf32>
    %3 = math.exp %2 : vector<1x2048xf32>
    %cst_1 = arith.constant 2.000000e+00 : f32
    %4 = vector.broadcast %cst_1 : f32 to vector<1x2048xf32>
    %5 = arith.addf %3, %4 : vector<1x2048xf32>
    %6 = arith.mulf %3, %5 : vector<1x2048xf32>
    %cst_2 = arith.constant 2.000000e+00 : f32
    %7 = vector.broadcast %cst_2 : f32 to vector<1x2048xf32>
    %8 = arith.addf %6, %7 : vector<1x2048xf32>
    %9 = tpu.reciprocal %8 {approx = true} : vector<1x2048xf32> -> vector<1x2048xf32>
    %10 = arith.mulf %8, %9 : vector<1x2048xf32>
    %cst_3 = arith.constant 2.000000e+00 : f32
    %11 = vector.broadcast %cst_3 : f32 to vector<1x2048xf32>
    %12 = arith.subf %11, %10 : vector<1x2048xf32>
    %13 = arith.mulf %9, %12 : vector<1x2048xf32>
    %14 = arith.mulf %0, %6 : vector<1x2048xf32>
    %15 = arith.mulf %14, %13 : vector<1x2048xf32>
    %cst_4 = arith.constant 2.000000e+01 : f32
    %16 = vector.broadcast %cst_4 : f32 to vector<1x2048xf32>
    %17 = arith.cmpf ogt, %0, %16 : vector<1x2048xf32>
    %18 = arith.select %17, %0, %15 : vector<1x2048xi1>, vector<1x2048xf32>
    %c0_5 = arith.constant 0 : index
    %c0_6 = arith.constant 0 : index
    %19 = vector.load %arg2[%c0_5, %c0_6] : memref<1x2048xf32, #tpu.memory_space<vmem>>, vector<1x2048xf32>
    tpu.vector_store %arg2[%c0_5, %c0_6], %18 {strides = array<i32>} : memref<1x2048xf32, #tpu.memory_space<vmem>>, vector<1x2048xf32>,
    return
  }
  func.func @transform_0(%arg0: i32) -> (i32, i32) {
    %c0_i32 = arith.constant 0 : i32
    %c0_i32_0 = arith.constant 0 : i32
    return %arg0, %c0_i32 : i32, i32
  }
  func.func @transform_1(%arg0: i32) -> (i32, i32) {
    %c0_i32 = arith.constant 0 : i32
    %c0_i32_0 = arith.constant 0 : i32
    return %arg0, %c0_i32 : i32, i32
  }
}

</mosaic_0001>

<llo_original>
// kernel: tpu_custom_call.1
$region0: #{tpu_custom_call.1}
  #allocation0 [shape = 'u32[]', space=smem, size = 0x4, offset = 0x4, fixed_abs, tag = 'smem constant byte address 0x4 - core index']
  #allocation1 [shape = 'u32[144,128]{1,0:T(1,128)}', space=vmem, size = 0x12000, scoped, tag = 'internal scratch']
  %s0 = inlined_call_operand.hbm [shape: f32[1,2048], index: 0, kind: input, shape index: {}]
  %s1 = inlined_call_operand.hbm [shape: f32[1,2048], index: 1, kind: output, shape index: {}]
  %s2 = sld [smem:[#allocation0]]
  $region18: #{tpu_custom_call.1} parent=0
    _
  %s4 = ssub.s32 1, %s2
  %s5 = scalar_select 0, %s4, %s2
  $region1: #{tpu_custom_call.1} parent=0
    #allocation2 [shape = 'u8[8192]{0}', space=vmem, size = 0x2000, scoped, tag = 'input window, operand 0, single buffered']
    #allocation3 [shape = 's32[1]{0}', space=sflag, size = 0x4, scoped, tag = 'scoped memory for tpu_custom_call.1']
    #allocation4 [shape = 's32[1]{0}', space=sflag, size = 0x4, scoped, tag = 'scoped memory for tpu_custom_call.1']
    #allocation5 [shape = 'u8[8192]{0}', space=vmem, size = 0x2000, scoped, tag = 'output window, operand 0, single buffered']
    %6 = vsyncpa [#allocation3], 0
    %7 = vsyncpa [#allocation4], 0
    // Predicated region
    $region2: #{tpu_custom_call.1} parent=1 // pred_check
      _
    $region3: #{tpu_custom_call.1} parent=1 // pred_check_branch
      %9 = sbr.rel (0) target = $region5
    $region4: #{tpu_custom_call.1} parent=1 // pred_region
      %s11 = ssub.s32 256, 256
      %12 = vsyncadd [#allocation3], %s11
      %s14 = sshll.u32 [#allocation2], 4
      %s15 = int_to_ptr.vmem [resolvable:$true] %s14
      %17 = dma.hbm_to_vmem [thread:$0]  %s0, 256, %s15, [#allocation3]
    $region5: #{tpu_custom_call.1} parent=1 // pred_fallthru
      _
    // Predicated region
    $region6: #{tpu_custom_call.1} parent=1 // pred_check
      _
    $region7: #{tpu_custom_call.1} parent=1 // pred_check_branch
      %19 = sbr.rel (0) target = $region9
    $region8: #{tpu_custom_call.1} parent=1 // pred_region
      %20 = dma.done [#allocation3], 256
    $region9: #{tpu_custom_call.1} parent=1 // pred_fallthru
      _
    %v21 = vld [vmem:[#allocation2] sm:$0xff]
    %v22 = vld [vmem:[#allocation2 + $0x8] sm:$0xff]
    %v23 = vmin.f32 %v21, 20.0
    %v24 = vmin.f32 %v22, 20.0
    %v25 = vmul.f32 %v23, 1.442695
    %v26 = vpow.pop %v25
    %v27 = vmul.f32 %v24, 1.442695
    %v28 = vpow.pop %v27
    %v29 = vadd.f32 %v26, 2.0
    %v30 = vadd.f32 %v28, 2.0
    %v31 = vmul.f32 %v26, %v29
    %v32 = vmul.f32 %v28, %v30
    %v33 = vadd.f32 %v31, 2.0
    %v34 = vadd.f32 %v32, 2.0
    %v35 = vrcp.pop %v33
    %v36 = vrcp.pop %v34
    %v37 = vmul.f32 %v33, %v35
    %v38 = vmul.f32 %v34, %v36
    %v39 = vsub.f32 2.0, %v37
    %v40 = vsub.f32 2.0, %v38
    %v41 = vmul.f32 %v35, %v39
    %v42 = vmul.f32 %v36, %v40
    %v43 = vmul.f32 %v21, %v31
    %v44 = vmul.f32 %v22, %v32
    %v45 = vmul.f32 %v43, %v41
    %v46 = vmul.f32 %v44, %v42
    %vm47 = vcmp.gt.f32.partialorder %v21, 20.0
    %vm48 = vcmp.gt.f32.partialorder %v22, 20.0
    %v49 = vsel %vm47, %v21, %v45
    %v50 = vsel %vm48, %v22, %v46
    %51 = vst [vmem:[#allocation5] sm:$0xff] %v49
    %52 = vst [vmem:[#allocation5 + $0x8] sm:$0xff] %v50
    // Predicated region
    $region10: #{tpu_custom_call.1} parent=1 // pred_check
      _
    $region11: #{tpu_custom_call.1} parent=1 // pred_check_branch
      %54 = sbr.rel (0) target = $region13
    $region12: #{tpu_custom_call.1} parent=1 // pred_region
      %s56 = ssub.s32 256, 256
      %57 = vsyncadd [#allocation4], %s56
      %s59 = sshll.u32 [#allocation5], 4
      %s60 = int_to_ptr.vmem [resolvable:$true] %s59
      %62 = dma.vmem_to_hbm [thread:$0]  %s60, 256, %s1, [#allocation4]
    $region13: #{tpu_custom_call.1} parent=1 // pred_fallthru
      _
    // Predicated region
    $region14: #{tpu_custom_call.1} parent=1 // pred_check
      _
    $region15: #{tpu_custom_call.1} parent=1 // pred_check_branch
      %64 = sbr.rel (0) target = $region17
    $region16: #{tpu_custom_call.1} parent=1 // pred_region
      %65 = dma.done [#allocation4], 256
    $region17: #{tpu_custom_call.1} parent=1 // pred_fallthru
      _
    %66 = vsyncpa [#allocation3], 1
    %67 = vsyncpa [#allocation4], 1

</llo_original>
